<compile_context>
chip_gen: v7x
topology: tpu7x:2x2x1
jax: 0.10.0
libtpu: 0.0.40
codegen_flags: <defaults>
</compile_context>

<pallas_src>
import functools

import jax
import jax.numpy as jnp
from jax.experimental import pallas as pl
from jax.experimental.pallas import tpu as pltpu


def _round_up(x, m):
    return ((x + m - 1) // m) * m


def _attention_kernel(prev_ref, enh_ref, we2t_ref, we1t_ref, be_ref, ww_ref,
                      out_ref, *, seq_len):
    """One decoder query per grid step; all ops kept 2D for robust lowering.

    prev_ref: (1, L, H)  f32   all GRU-layer hiddens of this query
    enh_ref:  (Sp, H)    bf16  zero-padded encoder hiddens (Sp = round_up(S,128))
    we2t_ref: (H, H)     bf16  W_e[:, H:].T  (encoder half of the energy layer)
    we1t_ref: (H, H)     bf16  W_e[:, :H].T  (decoder half of the energy layer)
    be_ref:   (1, H)     f32   energy-layer bias
    ww_ref:   (1, H)     bf16  weight-layer row (no bias)
    out_ref:  (1, 1, Sp) f32   attention weights, lane-dense over sequence
    """
    # sum over GRU layers, in-kernel (no extra per-step XLA dispatch)
    prev = jnp.sum(prev_ref[0], axis=0, keepdims=True)                    # (1, H) f32

    # decoder half of the energy layer: prev @ W_e[:, :H].T + b_e
    bias = jnp.dot(prev.astype(jnp.bfloat16), we1t_ref[...],
                   preferred_element_type=jnp.float32) + be_ref[...]      # (1, H) f32

    # encoder half of the energy layer: enh @ W_e[:, H:].T
    enh_proj = jnp.dot(enh_ref[...], we2t_ref[...],
                       preferred_element_type=jnp.float32)                # (Sp, H) f32

    scores = jnp.tanh(enh_proj + bias)                                    # (Sp, H) f32

    # logits[0, s] = sum_h ww[0, h] * scores[s, h]  (bf16 MXU, f32 acc) -> (1, Sp)
    logits = jax.lax.dot_general(
        ww_ref[...], scores.astype(jnp.bfloat16),
        dimension_numbers=(((1,), (1,)), ((), ())),
        preferred_element_type=jnp.float32)                               # (1, Sp)

    # mask padded sequence positions, softmax over the lane (sequence) axis
    col = jax.lax.broadcasted_iota(jnp.int32, logits.shape, 1)
    logits = jnp.where(col < seq_len, logits, -1e30)
    m = jnp.max(logits, axis=-1, keepdims=True)
    e = jnp.exp(logits - m)
    denom = jnp.sum(e, axis=-1, keepdims=True)
    # exact normalization (NOT approx reciprocal) so the weights sum to 1
    out_ref[0] = (e / denom).astype(out_ref.dtype)


def prepare_attention_params(params):
    """One-time re-layout of PyTorch-style params into kernel layout (arrays only)."""
    W_e = jnp.asarray(params["W_e"], jnp.float32)       # (H, 2H)
    b_e = jnp.asarray(params["b_e"], jnp.float32)       # (H,)
    W_w = jnp.asarray(params["W_w"], jnp.float32)       # (1, H)
    H = W_e.shape[0]
    return {
        "we1t": jnp.asarray(W_e[:, :H].T, jnp.bfloat16),   # decoder-hidden half
        "we2t": jnp.asarray(W_e[:, H:].T, jnp.bfloat16),   # encoder-hidden half
        "be":   b_e.reshape(1, H),                         # f32 bias
        "ww":   jnp.asarray(W_w.reshape(1, H), jnp.bfloat16),
    }


def prepare_encoder_hiddens(en_hiddens):
    """Once per input sentence: reshape, bf16 cast, zero-pad rows to a multiple of 128."""
    S, b, H = en_hiddens.shape
    assert b == 1, "module spec uses batch dim 1 for encoder hiddens"
    Sp = _round_up(S, 128)                   # lane-dense softmax / unmasked output stores
    enh = en_hiddens.reshape(S, H).astype(jnp.bfloat16)
    return jnp.pad(enh, ((0, Sp - S), (0, 0)))


@functools.partial(jax.jit, static_argnames=("seq_len",))
def attention_forward(prev_de_hidden, enh_pad, kparams, *, seq_len):
    """prev_de_hidden: (L, B, H); enh_pad: (Sp, H) bf16  ->  attention weights (S, B, 1)."""
    L, B, H = prev_de_hidden.shape
    Sp = enh_pad.shape[0]

    # layout plumbing only: decoder queries on the leading (grid) axis
    prev_q = jnp.swapaxes(prev_de_hidden, 0, 1).astype(jnp.float32)       # (B, L, H)

    out = pl.pallas_call(
        functools.partial(_attention_kernel, seq_len=seq_len),
        out_shape=jax.ShapeDtypeStruct((B, 1, Sp), jnp.float32),
        grid=(B,),
        in_specs=[
            pl.BlockSpec((1, L, H), lambda b: (b, 0, 0)),   # per-query decoder hiddens
            pl.BlockSpec((Sp, H), lambda b: (0, 0)),        # encoder hiddens (VMEM-resident)
            pl.BlockSpec((H, H), lambda b: (0, 0)),         # we2t (resident)
            pl.BlockSpec((H, H), lambda b: (0, 0)),         # we1t (resident)
            pl.BlockSpec((1, H), lambda b: (0, 0)),         # be
            pl.BlockSpec((1, H), lambda b: (0, 0)),         # ww
        ],
        out_specs=pl.BlockSpec((1, 1, Sp), lambda b: (b, 0, 0)),
        compiler_params=pltpu.CompilerParams(
            dimension_semantics=("parallel",)),             # v7x: both TCs when B > 1
    )(prev_q, enh_pad, kparams["we2t"], kparams["we1t"],
      kparams["be"], kparams["ww"])

    # (B, 1, Sp) lane-dense kernel output -> module layout (S, B, 1)
    w = out[:, 0, :seq_len]                                 # (B, S)
    return jnp.transpose(w)[:, :, None]                     # (S, B, 1)
    # TODO(synk): for very large beam counts, process >1 query per grid step
    # (batched einsum over a (Bb, Sp, H) scores block) to also fill MXU rows.


def _reference(prev_de_hidden, en_hiddens, params):
    W_e, b_e, W_w = params["W_e"], params["b_e"], params["W_w"]
    prev = jnp.sum(prev_de_hidden, axis=0)                          # (B, H)
    S = en_hiddens.shape[0]
    B, H = prev.shape
    hidden_rep = jnp.broadcast_to(prev[None], (S, B, H))            # (S, B, H)
    enh_b = jnp.broadcast_to(en_hiddens, (S, B, H))                 # (S, B, H)
    combined = jnp.concatenate([hidden_rep, enh_b], axis=2)         # (S, B, 2H)
    scores = jnp.tanh(combined @ W_e.T + b_e)                       # (S, B, H)
    logits = scores @ W_w.T                                         # (S, B, 1)
    return jax.nn.softmax(logits, axis=0)


if __name__ == "__main__":
    hidden_size = 32
    num_gru_layers = 2
    seq_length = 8

    key = jax.random.PRNGKey(0)
    k1, k2, k3, k4, k5, k6 = jax.random.split(key, 6)

    # Deterministic parameter init (nn.Linear-style uniform bounds).
    bound_e = 1.0 / jnp.sqrt(2.0 * hidden_size)
    bound_w = 1.0 / jnp.sqrt(float(hidden_size))
    params = {
        "W_e": jax.random.uniform(k1, (hidden_size, 2 * hidden_size),
                                  jnp.float32, -bound_e, bound_e),
        "b_e": jax.random.uniform(k2, (hidden_size,), jnp.float32, -bound_e, bound_e),
        "W_w": jax.random.uniform(k3, (1, hidden_size), jnp.float32, -bound_w, bound_w),
    }

    prev_de_hidden = jax.random.normal(k4, (num_gru_layers, 1, hidden_size), jnp.float32)
    en_hiddens = jax.random.normal(k5, (seq_length, 1, hidden_size), jnp.float32)

    kparams = prepare_attention_params(params)      # once per model
    enh_pad = prepare_encoder_hiddens(en_hiddens)   # once per input sentence

    # --- module-equivalent single-query forward ----------------------------
    w = attention_forward(prev_de_hidden, enh_pad, kparams, seq_len=seq_length)
    jax.block_until_ready(w)
    w_ref = _reference(prev_de_hidden, en_hiddens, params)
    assert w.shape == (seq_length, 1, 1)
    # bf16 MXU operands => relaxed (but tight-for-bf16) tolerance
    assert jnp.allclose(w, w_ref, atol=2e-3, rtol=1e-2)
    assert jnp.allclose(jnp.sum(w), 1.0, atol=1e-3)      # exact normalization

    # --- batched decoder queries (beams / steps) share one pallas_call -----
    n_beams = 4
    prev_batch = jax.random.normal(k6, (num_gru_layers, n_beams, hidden_size), jnp.float32)
    wb = attention_forward(prev_batch, enh_pad, kparams, seq_len=seq_length)
    jax.block_until_ready(wb)
    wb_ref = _reference(prev_batch, en_hiddens, params)
    assert wb.shape == (seq_length, n_beams, 1)
    assert jnp.allclose(wb, wb_ref, atol=2e-3, rtol=1e-2)
    assert jnp.allclose(jnp.sum(wb, axis=0), 1.0, atol=1e-3)

    print("KERNEL_OK")
</pallas_src>

<mosaic_0001>
module attributes {stable_mosaic.version = 11 : i64} {
  func.func @_attention_kernel(%arg0: i32, %arg1: memref<1x2x32xf32, #tpu.memory_space<vmem>>, %arg2: memref<128x32xbf16, #tpu.memory_space<vmem>>, %arg3: memref<32x32xbf16, #tpu.memory_space<vmem>>, %arg4: memref<32x32xbf16, #tpu.memory_space<vmem>>, %arg5: memref<1x32xf32, #tpu.memory_space<vmem>>, %arg6: memref<1x32xbf16, #tpu.memory_space<vmem>>, %arg7: memref<1x1x128xf32, #tpu.memory_space<vmem>>) attributes {dimension_semantics = [#tpu.dimension_semantics<parallel>], iteration_bounds = array<i64: 1>, scalar_prefetch = 0 : i64, scratch_operands = 0 : i64, tpu.core_type = #tpu.core_type<tc>, window_params = [{transform_indices = @transform_0, window_bounds = array<i64: 1, 2, 32>}, {pipeline_mode = #tpu.pipeline_mode<synchronous>, transform_indices = @transform_1, window_bounds = array<i64: 128, 32>}, {pipeline_mode = #tpu.pipeline_mode<synchronous>, transform_indices = @transform_2, window_bounds = array<i64: 32, 32>}, {pipeline_mode = #tpu.pipeline_mode<synchronous>, transform_indices = @transform_3, window_bounds = array<i64: 32, 32>}, {pipeline_mode = #tpu.pipeline_mode<synchronous>, transform_indices = @transform_4, window_bounds = array<i64: 1, 32>}, {pipeline_mode = #tpu.pipeline_mode<synchronous>, transform_indices = @transform_5, window_bounds = array<i64: 1, 32>}, {transform_indices = @transform_6, window_bounds = array<i64: 1, 1, 128>}]} {
    %c0 = arith.constant 0 : index
    %c0_0 = arith.constant 0 : index
    %c0_1 = arith.constant 0 : index
    %0 = vector.load %arg1[%c0, %c0_0, %c0_1] : memref<1x2x32xf32, #tpu.memory_space<vmem>>, vector<1x2x32xf32>
    %1 = vector.shape_cast %0 : vector<1x2x32xf32> to vector<2x32xf32>
    %cst = arith.constant dense<0.000000e+00> : vector<32xf32>
    %2 = vector.multi_reduction <add>, %1, %cst [0] : vector<2x32xf32> to vector<32xf32>
    %3 = vector.shape_cast %2 : vector<32xf32> to vector<1x32xf32>
    %4 = arith.truncf %3 : vector<1x32xf32> to vector<1x32xbf16>
    %c0_2 = arith.constant 0 : index
    %c0_3 = arith.constant 0 : index
    %5 = vector.load %arg4[%c0_2, %c0_3] : memref<32x32xbf16, #tpu.memory_space<vmem>>, vector<32x32xbf16>
    %cst_4 = arith.constant dense<0.000000e+00> : vector<1x32xf32>
    %6 = tpu.matmul %4, %5, %cst_4 {dimension_numbers = #tpu.dot_dimension_numbers<[1], [0], [0], [1], [0, 0, 1, 1], [], []>} : vector<1x32xbf16>, vector<32x32xbf16>, vector<1x32xf32> -> vector<1x32xf32>
    %c0_5 = arith.constant 0 : index
    %c0_6 = arith.constant 0 : index
    %7 = vector.load %arg5[%c0_5, %c0_6] : memref<1x32xf32, #tpu.memory_space<vmem>>, vector<1x32xf32>
    %8 = arith.addf %6, %7 : vector<1x32xf32>
    %c0_7 = arith.constant 0 : index
    %c0_8 = arith.constant 0 : index
    %9 = vector.load %arg2[%c0_7, %c0_8] : memref<128x32xbf16, #tpu.memory_space<vmem>>, vector<128x32xbf16>
    %c0_9 = arith.constant 0 : index
    %c0_10 = arith.constant 0 : index
    %10 = vector.load %arg3[%c0_9, %c0_10] : memref<32x32xbf16, #tpu.memory_space<vmem>>, vector<32x32xbf16>
    %cst_11 = arith.constant dense<0.000000e+00> : vector<128x32xf32>
    %11 = tpu.matmul %9, %10, %cst_11 {dimension_numbers = #tpu.dot_dimension_numbers<[1], [0], [0], [1], [0, 0, 1, 1], [], []>} : vector<128x32xbf16>, vector<32x32xbf16>, vector<128x32xf32> -> vector<128x32xf32>
    %12 = vector.broadcast %8 : vector<1x32xf32> to vector<128x32xf32>
    %13 = arith.addf %11, %12 : vector<128x32xf32>
    %14 = math.tanh %13 : vector<128x32xf32>
    %c0_12 = arith.constant 0 : index
    %c0_13 = arith.constant 0 : index
    %15 = vector.load %arg6[%c0_12, %c0_13] : memref<1x32xbf16, #tpu.memory_space<vmem>>, vector<1x32xbf16>
    %16 = arith.truncf %14 : vector<128x32xf32> to vector<128x32xbf16>
    %cst_14 = arith.constant dense<0.000000e+00> : vector<1x128xf32>
    %17 = tpu.matmul %15, %16, %cst_14 {dimension_numbers = #tpu.dot_dimension_numbers<[1], [1], [0], [0], [0, 0, 1, 0], [], []>} : vector<1x32xbf16>, vector<128x32xbf16>, vector<1x128xf32> -> vector<1x128xf32>
    %18 = tpu.iota {dimensions = array<i32: 1>} : vector<1x128xi32>
    %c8_i32 = arith.constant 8 : i32
    %19 = vector.broadcast %c8_i32 : i32 to vector<1x128xi32>
    %20 = arith.cmpi slt, %18, %19 : vector<1x128xi32>
    %cst_15 = arith.constant -1.000000e+30 : f32
    %21 = vector.broadcast %cst_15 : f32 to vector<1x128xf32>
    %22 = arith.select %20, %17, %21 : vector<1x128xi1>, vector<1x128xf32>
    %cst_16 = arith.constant dense<0xFF800000> : vector<1xf32>
    %23 = vector.multi_reduction <maximumf>, %22, %cst_16 [1] : vector<1x128xf32> to vector<1xf32>
    %24 = vector.shape_cast %23 : vector<1xf32> to vector<1x1xf32>
    %25 = vector.broadcast %24 : vector<1x1xf32> to vector<1x128xf32>
    %26 = arith.subf %22, %25 : vector<1x128xf32>
    %27 = math.exp %26 : vector<1x128xf32>
    %cst_17 = arith.constant dense<0.000000e+00> : vector<1xf32>
    %28 = vector.multi_reduction <add>, %27, %cst_17 [1] : vector<1x128xf32> to vector<1xf32>
    %29 = vector.shape_cast %28 : vector<1xf32> to vector<1x1xf32>
    %30 = vector.broadcast %29 : vector<1x1xf32> to vector<1x128xf32>
    %31 = arith.divf %27, %30 : vector<1x128xf32>
    %c0_18 = arith.constant 0 : index
    %c0_19 = arith.constant 0 : index
    %c0_20 = arith.constant 0 : index
    %32 = vector.load %arg7[%c0_18, %c0_19, %c0_20] : memref<1x1x128xf32, #tpu.memory_space<vmem>>, vector<1x1x128xf32>
    %33 = vector.shape_cast %32 : vector<1x1x128xf32> to vector<1x128xf32>
    %34 = vector.shape_cast %31 : vector<1x128xf32> to vector<1x1x128xf32>
    tpu.vector_store %arg7[%c0_18, %c0_19, %c0_20], %34 {strides = array<i32>} : memref<1x1x128xf32, #tpu.memory_space<vmem>>, vector<1x1x128xf32>,
    return
  }
  func.func @transform_0(%arg0: i32) -> (i32, i32, i32) {
    %c0_i32 = arith.constant 0 : i32
    %c0_i32_0 = arith.constant 0 : i32
    %c0_i32_1 = arith.constant 0 : i32
    return %arg0, %c0_i32, %c0_i32_0 : i32, i32, i32
  }
  func.func @transform_1(%arg0: i32) -> (i32, i32) {
    %c0_i32 = arith.constant 0 : i32
    %c0_i32_0 = arith.constant 0 : i32
    %c0_i32_1 = arith.constant 0 : i32
    return %c0_i32, %c0_i32_0 : i32, i32
  }
  func.func @transform_2(%arg0: i32) -> (i32, i32) {
    %c0_i32 = arith.constant 0 : i32
    %c0_i32_0 = arith.constant 0 : i32
    %c0_i32_1 = arith.constant 0 : i32
    return %c0_i32, %c0_i32_0 : i32, i32
  }
  func.func @transform_3(%arg0: i32) -> (i32, i32) {
    %c0_i32 = arith.constant 0 : i32
    %c0_i32_0 = arith.constant 0 : i32
    %c0_i32_1 = arith.constant 0 : i32
    return %c0_i32, %c0_i32_0 : i32, i32
  }
  func.func @transform_4(%arg0: i32) -> (i32, i32) {
    %c0_i32 = arith.constant 0 : i32
    %c0_i32_0 = arith.constant 0 : i32
    %c0_i32_1 = arith.constant 0 : i32
    return %c0_i32, %c0_i32_0 : i32, i32
  }
  func.func @transform_5(%arg0: i32) -> (i32, i32) {
    %c0_i32 = arith.constant 0 : i32
    %c0_i32_0 = arith.constant 0 : i32
    %c0_i32_1 = arith.constant 0 : i32
    return %c0_i32, %c0_i32_0 : i32, i32
  }
  func.func @transform_6(%arg0: i32) -> (i32, i32, i32) {
    %c0_i32 = arith.constant 0 : i32
    %c0_i32_0 = arith.constant 0 : i32
    %c0_i32_1 = arith.constant 0 : i32
    return %arg0, %c0_i32, %c0_i32_0 : i32, i32, i32
  }
}

</mosaic_0001>

<llo_original>
// kernel: attention_forward.1
$region0: #{attention_forward.1}
  #allocation0 [shape = 'u32[]', space=smem, size = 0x4, offset = 0x4, fixed_abs, tag = 'smem constant byte address 0x4 - core index']
  #allocation1 [shape = 'u32[144,128]{1,0:T(1,128)}', space=vmem, size = 0x12000, scoped, tag = 'internal scratch']
  %s0 = inlined_call_operand.vmem [shape: f32[1,2,32], index: 0, kind: input, shape index: {}]
  %s1 = inlined_call_operand.vmem [shape: bf16[128,32], index: 1, kind: input, shape index: {}]
  %s2 = inlined_call_operand.vmem [shape: bf16[32,32], index: 2, kind: input, shape index: {}]
  %s3 = inlined_call_operand.vmem [shape: bf16[32,32], index: 3, kind: input, shape index: {}]
  %s4 = inlined_call_operand.vmem [shape: f32[1,32], index: 4, kind: input, shape index: {}]
  %s5 = inlined_call_operand.vmem [shape: bf16[1,32], index: 5, kind: input, shape index: {}]
  %s6 = inlined_call_operand.vmem [shape: f32[1,1,128], index: 6, kind: output, shape index: {}]
  %s7 = sld [smem:[#allocation0]]
  $region34: #{attention_forward.1} parent=0
    _
  %s9 = ssub.s32 1, %s7
  %s10 = scalar_select 0, %s9, %s7
  // Predicated region
  $region2: #{attention_forward.1} parent=0 // pred_check
    _
  $region3: #{attention_forward.1} parent=0 // pred_check_branch
    %12 = sbr.rel (0) target = $region5
  $region4: #{attention_forward.1} parent=0 // pred_region
    _
  $region5: #{attention_forward.1} parent=0 // pred_fallthru
    _
  // Predicated region
  $region6: #{attention_forward.1} parent=0 // pred_check
    _
  $region7: #{attention_forward.1} parent=0 // pred_check_branch
    %14 = sbr.rel (0) target = $region9
  $region8: #{attention_forward.1} parent=0 // pred_region
    _
  $region9: #{attention_forward.1} parent=0 // pred_fallthru
    _
  // Predicated region
  $region10: #{attention_forward.1} parent=0 // pred_check
    _
  $region11: #{attention_forward.1} parent=0 // pred_check_branch
    %16 = sbr.rel (0) target = $region13
  $region12: #{attention_forward.1} parent=0 // pred_region
    _
  $region13: #{attention_forward.1} parent=0 // pred_fallthru
    _
  // Predicated region
  $region14: #{attention_forward.1} parent=0 // pred_check
    _
  $region15: #{attention_forward.1} parent=0 // pred_check_branch
    %18 = sbr.rel (0) target = $region17
  $region16: #{attention_forward.1} parent=0 // pred_region
    _
  $region17: #{attention_forward.1} parent=0 // pred_fallthru
    _
  // Predicated region
  $region18: #{attention_forward.1} parent=0 // pred_check
    _
  $region19: #{attention_forward.1} parent=0 // pred_check_branch
    %20 = sbr.rel (0) target = $region21
  $region20: #{attention_forward.1} parent=0 // pred_region
    _
  $region21: #{attention_forward.1} parent=0 // pred_fallthru
    _
  // Predicated region
  $region22: #{attention_forward.1} parent=0 // pred_check
    _
  $region23: #{attention_forward.1} parent=0 // pred_check_branch
    %22 = sbr.rel (0) target = $region25
  $region24: #{attention_forward.1} parent=0 // pred_region
    _
  $region25: #{attention_forward.1} parent=0 // pred_fallthru
    _
  %v24 = vld [vmem:[%s0] sm:$0x3]
  %vm25 = vcmask 254976
  %v26 = vsel %vm25, %v24, 0.0
  %v27 = vrot.slane %v26, 4
  %v28 = vadd.f32 %v26, %v27
  %v29 = vrot.slane %v28, 2
  %v30 = vadd.f32 %v28, %v29
  %v31 = vrot.slane %v30, 1
  %v32 = vadd.f32 %v30, %v31
  %v33 = vpack.c.bf16 %v32, %v32
  %v34 = vld [vmem:[%s3] sm:$0xf]
  %v35 = vld [vmem:[%s3 + $0x4] sm:$0xf]
  %v36 = vld [vmem:[%s3 + $0x8] sm:$0xf]
  %v37 = vld [vmem:[%s3 + $0xc] sm:$0xf]
  %v38 = vld [vmem:[%s4] sm:$0x1]
  %v43 = vunpack.c.l.b16 %v34
  %v44 = vunpack.c.l.b16 %v35
  %v45 = vunpack.c.l.b16 %v36
  %v46 = vunpack.c.l.b16 %v37
  %v47 = vpack.c.b16 %v44, %v43
  %v48 = vpack.c.b16 %v46, %v45
  %vm51 = vcmask 261120
  %v53 = vsel %vm51, %v33, 0
  %55 = vmatprep.subr.bf16.mxu0 0
  %56 = vmatpush1.bf16.msra.mxu0 %v47
  %57 = vmatprep.subr.bf16.mxu0 0
  %58 = vmatpush1.bf16.msra.mxu0 %v48
  %59 = vmatprep.subr.bf16.mxu0 0
  %60 = vmatpush1.bf16.msra.mxu0 0
  %61 = vmatprep.subr.bf16.mxu0 0
  %62 = vmatpush1.bf16.msra.mxu0 0
  %63 = vmatprep.subr.bf16.mxu0 0
  %64 = vmatpush1.bf16.msra.mxu0 0
  %65 = vmatprep.subr.bf16.mxu0 0
  %66 = vmatpush1.bf16.msra.mxu0 0
  %67 = vmatprep.subr.bf16.mxu0 0
  %68 = vmatpush1.bf16.msra.mxu0 0
  %69 = vmatprep.subr.bf16.mxu0 0
  %70 = vmatpush1.bf16.msra.mxu0 0
  %71 = vmatprep.subr.bf16.mxu0 0
  %72 = vmatpush1.bf16.msra.mxu0 0
  %73 = vmatprep.subr.bf16.mxu0 0
  %74 = vmatpush1.bf16.msra.mxu0 0
  %75 = vmatprep.subr.bf16.mxu0 0
  %76 = vmatpush1.bf16.msra.mxu0 0
  %77 = vmatprep.subr.bf16.mxu0 0
  %78 = vmatpush1.bf16.msra.mxu0 0
  %79 = vmatprep.subr.bf16.mxu0 0
  %80 = vmatpush1.bf16.msra.mxu0 0
  %81 = vmatprep.subr.bf16.mxu0 0
  %82 = vmatpush1.bf16.msra.mxu0 0
  %83 = vmatprep.subr.bf16.mxu0 0
  %84 = vmatpush1.bf16.msra.mxu0 0
  %85 = vmatprep.subr.bf16.mxu0 0
  %86 = vmatpush1.bf16.msra.mxu0 0
  %87 = vmatprep.mubr.bf16.mxu0 0
  %88 = vmatmul.mubr.bf16.gmra.mrb[0].mxu0 %v53
  %v89 = vpop.f32.mrb[0].mxu0
  %v90 = vadd.f32 %v38, %v89
  %v91 = vpop.f32.mrb[0].mxu0
  %v92 = vpop.f32.mrb[0].mxu0
  %v93 = vpop.f32.mrb[0].mxu0
  %94 = vdwg.mxu0
  %v95 = vld [vmem:[%s1] sm:$0xf]
  %v96 = vld [vmem:[%s1 + $0x4] sm:$0xf]
  %v97 = vld [vmem:[%s1 + $0x8] sm:$0xf]
  %v98 = vld [vmem:[%s1 + $0xc] sm:$0xf]
  %v99 = vld [vmem:[%s1 + $0x10] sm:$0xf]
  %v100 = vld [vmem:[%s1 + $0x14] sm:$0xf]
  %v101 = vld [vmem:[%s1 + $0x18] sm:$0xf]
  %v102 = vld [vmem:[%s1 + $0x1c] sm:$0xf]
  %v103 = vld [vmem:[%s1 + $0x20] sm:$0xf]
  %v104 = vld [vmem:[%s1 + $0x24] sm:$0xf]
  %v105 = vld [vmem:[%s1 + $0x28] sm:$0xf]
  %v106 = vld [vmem:[%s1 + $0x2c] sm:$0xf]
  %v107 = vld [vmem:[%s1 + $0x30] sm:$0xf]
  %v108 = vld [vmem:[%s1 + $0x34] sm:$0xf]
  %v109 = vld [vmem:[%s1 + $0x38] sm:$0xf]
  %v110 = vld [vmem:[%s1 + $0x3c] sm:$0xf]
  %v111 = vld [vmem:[%s2] sm:$0xf]
  %v112 = vld [vmem:[%s2 + $0x4] sm:$0xf]
  %v113 = vld [vmem:[%s2 + $0x8] sm:$0xf]
  %v114 = vld [vmem:[%s2 + $0xc] sm:$0xf]
  %v115 = vlaneseq
  %v116 = vshrl.u32 %v115, 7
  %v117 = vsub.s32 0, %v116
  %v118 = vrot.slane %v90, %v117
  %v135 = vunpack.c.l.b16 %v95
  %v136 = vunpack.c.l.b16 %v96
  %v137 = vunpack.c.l.b16 %v97
  %v138 = vunpack.c.l.b16 %v98
  %v139 = vunpack.c.l.b16 %v99
  %v140 = vunpack.c.l.b16 %v100
  %v141 = vunpack.c.l.b16 %v101
  %v142 = vunpack.c.l.b16 %v102
  %v143 = vunpack.c.l.b16 %v103
  %v144 = vunpack.c.l.b16 %v104
  %v145 = vunpack.c.l.b16 %v105
  %v146 = vunpack.c.l.b16 %v106
  %v147 = vunpack.c.l.b16 %v107
  %v148 = vunpack.c.l.b16 %v108
  %v149 = vunpack.c.l.b16 %v109
  %v150 = vunpack.c.l.b16 %v110
  %v151 = vpack.c.b16 %v136, %v135
  %v152 = vpack.c.b16 %v138, %v137
  %v153 = vpack.c.b16 %v140, %v139
  %v154 = vpack.c.b16 %v142, %v141
  %v155 = vpack.c.b16 %v144, %v143
  %v156 = vpack.c.b16 %v146, %v145
  %v157 = vpack.c.b16 %v148, %v147
  %v158 = vpack.c.b16 %v150, %v149
  %v163 = vunpack.c.l.b16 %v111
  %v164 = vunpack.c.l.b16 %v112
  %v165 = vunpack.c.l.b16 %v113
  %v166 = vunpack.c.l.b16 %v114
  %v167 = vpack.c.b16 %v164, %v163
  %v168 = vpack.c.b16 %v166, %v165
  %v172 = vsel %vm51, %v151, 0
  %v175 = vsel %vm51, %v152, 0
  %v178 = vsel %vm51, %v153, 0
  %v181 = vsel %vm51, %v154, 0
  %v184 = vsel %vm51, %v155, 0
  %v187 = vsel %vm51, %v156, 0
  %v190 = vsel %vm51, %v157, 0
  %v193 = vsel %vm51, %v158, 0
  %195 = vmatprep.subr.bf16.mxu0 0
  %196 = vmatpush1.bf16.msra.mxu0 %v167
  %197 = vmatprep.subr.bf16.mxu0 0
  %198 = vmatpush1.bf16.msra.mxu0 %v168
  %199 = vmatprep.subr.bf16.mxu0 0
  %200 = vmatpush1.bf16.msra.mxu0 0
  %201 = vmatprep.subr.bf16.mxu0 0
  %202 = vmatpush1.bf16.msra.mxu0 0
  %203 = vmatprep.subr.bf16.mxu0 0
  %204 = vmatpush1.bf16.msra.mxu0 0
  %205 = vmatprep.subr.bf16.mxu0 0
  %206 = vmatpush1.bf16.msra.mxu0 0
  %207 = vmatprep.subr.bf16.mxu0 0
  %208 = vmatpush1.bf16.msra.mxu0 0
  %209 = vmatprep.subr.bf16.mxu0 0
  %210 = vmatpush1.bf16.msra.mxu0 0
  %211 = vmatprep.subr.bf16.mxu0 0
  %212 = vmatpush1.bf16.msra.mxu0 0
  %213 = vmatprep.subr.bf16.mxu0 0
  %214 = vmatpush1.bf16.msra.mxu0 0
  %215 = vmatprep.subr.bf16.mxu0 0
  %216 = vmatpush1.bf16.msra.mxu0 0
  %217 = vmatprep.subr.bf16.mxu0 0
  %218 = vmatpush1.bf16.msra.mxu0 0
  %219 = vmatprep.subr.bf16.mxu0 0
  %220 = vmatpush1.bf16.msra.mxu0 0
  %221 = vmatprep.subr.bf16.mxu0 0
  %222 = vmatpush1.bf16.msra.mxu0 0
  %223 = vmatprep.subr.bf16.mxu0 0
  %224 = vmatpush1.bf16.msra.mxu0 0
  %225 = vmatprep.subr.bf16.mxu0 0
  %226 = vmatpush1.bf16.msra.mxu0 0
  %227 = vmatprep.mubr.bf16.mxu0 0
  %228 = vmatmul.mubr.bf16.gmra.mrb[0].mxu0 %v172
  %v229 = vpop.f32.mrb[0].mxu0
  %v230 = vadd.f32 %v118, %v229
  %v231 = vpop.f32.mrb[0].mxu0
  %v232 = vpop.f32.mrb[0].mxu0
  %v233 = vadd.f32 %v118, %v232
  %v234 = vpop.f32.mrb[0].mxu0
  %235 = vmatprep.mubr.bf16.mxu0 0
  %236 = vmatmul.mubr.bf16.gmra.mrb[0].mxu0 %v175
  %v237 = vpop.f32.mrb[0].mxu0
  %v238 = vadd.f32 %v118, %v237
  %v239 = vpop.f32.mrb[0].mxu0
  %v240 = vpop.f32.mrb[0].mxu0
  %v241 = vadd.f32 %v118, %v240
  %v242 = vpop.f32.mrb[0].mxu0
  %243 = vmatprep.mubr.bf16.mxu0 0
  %244 = vmatmul.mubr.bf16.gmra.mrb[0].mxu0 %v178
  %v245 = vpop.f32.mrb[0].mxu0
  %v246 = vadd.f32 %v118, %v245
  %v247 = vpop.f32.mrb[0].mxu0
  %v248 = vpop.f32.mrb[0].mxu0
  %v249 = vadd.f32 %v118, %v248
  %v250 = vpop.f32.mrb[0].mxu0
  %251 = vmatprep.mubr.bf16.mxu0 0
  %252 = vmatmul.mubr.bf16.gmra.mrb[0].mxu0 %v181
  %v253 = vpop.f32.mrb[0].mxu0
  %v254 = vadd.f32 %v118, %v253
  %v255 = vpop.f32.mrb[0].mxu0
  %v256 = vpop.f32.mrb[0].mxu0
  %v257 = vadd.f32 %v118, %v256
  %v258 = vpop.f32.mrb[0].mxu0
  %259 = vmatprep.mubr.bf16.mxu0 0
  %260 = vmatmul.mubr.bf16.gmra.mrb[0].mxu0 %v184
  %v261 = vpop.f32.mrb[0].mxu0
  %v262 = vadd.f32 %v118, %v261
  %v263 = vpop.f32.mrb[0].mxu0
  %v264 = vpop.f32.mrb[0].mxu0
  %v265 = vadd.f32 %v118, %v264
  %v266 = vpop.f32.mrb[0].mxu0
  %267 = vmatprep.mubr.bf16.mxu0 0
  %268 = vmatmul.mubr.bf16.gmra.mrb[0].mxu0 %v187
  %v269 = vpop.f32.mrb[0].mxu0
  %v270 = vadd.f32 %v118, %v269
  %v271 = vpop.f32.mrb[0].mxu0
  %v272 = vpop.f32.mrb[0].mxu0
  %v273 = vadd.f32 %v118, %v272
  %v274 = vpop.f32.mrb[0].mxu0
  %275 = vmatprep.mubr.bf16.mxu0 0
  %276 = vmatmul.mubr.bf16.gmra.mrb[0].mxu0 %v190
  %v277 = vpop.f32.mrb[0].mxu0
  %v278 = vadd.f32 %v118, %v277
  %v279 = vpop.f32.mrb[0].mxu0
  %v280 = vpop.f32.mrb[0].mxu0
  %v281 = vadd.f32 %v118, %v280
  %v282 = vpop.f32.mrb[0].mxu0
  %283 = vmatprep.mubr.bf16.mxu0 0
  %284 = vmatmul.mubr.bf16.gmra.mrb[0].mxu0 %v193
  %v285 = vpop.f32.mrb[0].mxu0
  %v286 = vadd.f32 %v118, %v285
  %v287 = vpop.f32.mrb[0].mxu0
  %v288 = vpop.f32.mrb[0].mxu0
  %v289 = vadd.f32 %v118, %v288
  %v290 = vpop.f32.mrb[0].mxu0
  %291 = vdwg.mxu0
  %v292 = vtanh.pop %v230
  %v293 = vtanh.pop %v233
  %v294 = vtanh.pop %v238
  %v295 = vtanh.pop %v241
  %v296 = vtanh.pop %v246
  %v297 = vtanh.pop %v249
  %v298 = vtanh.pop %v254
  %v299 = vtanh.pop %v257
  %v300 = vtanh.pop %v262
  %v301 = vtanh.pop %v265
  %v302 = vtanh.pop %v270
  %v303 = vtanh.pop %v273
  %v304 = vtanh.pop %v278
  %v305 = vtanh.pop %v281
  %v306 = vtanh.pop %v286
  %v307 = vtanh.pop %v289
  %v308 = vld [vmem:[%s5] sm:$0x1]
  %v309 = vpack.c.bf16 %v293, %v292
  %v310 = vpack.c.bf16 %v295, %v294
  %v311 = vpack.c.bf16 %v297, %v296
  %v312 = vpack.c.bf16 %v299, %v298
  %v313 = vpack.c.bf16 %v301, %v300
  %v314 = vpack.c.bf16 %v303, %v302
  %v315 = vpack.c.bf16 %v305, %v304
  %v316 = vpack.c.bf16 %v307, %v306
  %v318 = vsel %vm51, %v308, 0
  %v321 = vsel %vm51, %v309, 0
  %v324 = vsel %vm51, %v310, 0
  %v327 = vsel %vm51, %v311, 0
  %v330 = vsel %vm51, %v312, 0
  %v333 = vsel %vm51, %v313, 0
  %v336 = vsel %vm51, %v314, 0
  %v339 = vsel %vm51, %v315, 0
  %v342 = vsel %vm51, %v316, 0
  %344 = vmatprep.subr.bf16.mxu0 0
  %345 = vmatpush1.bf16.xpose.msra.mxu0 %v321
  %346 = vmatprep.subr.bf16.mxu0 0
  %347 = vmatpush1.bf16.xpose.msra.mxu0 %v324
  %348 = vmatprep.subr.bf16.mxu0 0
  %349 = vmatpush1.bf16.xpose.msra.mxu0 %v327
  %350 = vmatprep.subr.bf16.mxu0 0
  %351 = vmatpush1.bf16.xpose.msra.mxu0 %v330
  %352 = vmatprep.subr.bf16.mxu0 0
  %353 = vmatpush1.bf16.xpose.msra.mxu0 %v333
  %354 = vmatprep.subr.bf16.mxu0 0
  %355 = vmatpush1.bf16.xpose.msra.mxu0 %v336
  %356 = vmatprep.subr.bf16.mxu0 0
  %357 = vmatpush1.bf16.xpose.msra.mxu0 %v339
  %358 = vmatprep.subr.bf16.mxu0 0
  %359 = vmatpush1.bf16.xpose.msra.mxu0 %v342
  %360 = vmatprep.subr.bf16.mxu0 0
  %361 = vmatpush1.bf16.xpose.msra.mxu0 0
  %362 = vmatprep.subr.bf16.mxu0 0
  %363 = vmatpush1.bf16.xpose.msra.mxu0 0
  %364 = vmatprep.subr.bf16.mxu0 0
  %365 = vmatpush1.bf16.xpose.msra.mxu0 0
  %366 = vmatprep.subr.bf16.mxu0 0
  %367 = vmatpush1.bf16.xpose.msra.mxu0 0
  %368 = vmatprep.subr.bf16.mxu0 0
  %369 = vmatpush1.bf16.xpose.msra.mxu0 0
  %370 = vmatprep.subr.bf16.mxu0 0
  %371 = vmatpush1.bf16.xpose.msra.mxu0 0
  %372 = vmatprep.subr.bf16.mxu0 0
  %373 = vmatpush1.bf16.xpose.msra.mxu0 0
  %374 = vmatprep.subr.bf16.mxu0 0
  %375 = vmatpush1.bf16.xpose.msra.mxu0 0
  %376 = vmatprep.mubr.bf16.mxu0 0
  %377 = vmatmul.mubr.bf16.gmra.mrb[0].mxu0 %v318
  %v378 = vpop.f32.mrb[0].mxu0
  %v379 = vadd.f32 0.0, %v378
  %v380 = vpop.f32.mrb[0].mxu0
  %v381 = vpop.f32.mrb[0].mxu0
  %v382 = vpop.f32.mrb[0].mxu0
  %383 = vdwg.mxu0
  %v384 = vlaneseq
  %v385 = vand.u32 %v384, 127
  %vm386 = vcmp.lt.s32.totalorder %v385, 8
  %v387 = vsel %vm386, %v379, -1e+30
  %vm388 = vcmask 1040384
  %v389 = vsel %vm388, %v387, -inf
  %390 = vmax.xlane.f32.xlu0 %v389
  %v391 = vpop.xlane.xlu0 %390
  %v392 = vsub.f32 %v387, %v391
  %v393 = vmul.f32 %v392, 1.442695
  %v394 = vpow.pop %v393
  %v395 = vsel %vm388, %v394, 0.0
  %396 = vadd.xlane.f32.xlu0 %v395
  %v397 = vpop.xlane.xlu0 %396
  %v398 = vrcp.pop %v397
  %v399 = vmul.f32 %v394, %v398
  %400 = vst [vmem:[%s6] sm:$0x1] %v399
  // Predicated region
  $region26: #{attention_forward.1} parent=0 // pred_check
    _
  $region27: #{attention_forward.1} parent=0 // pred_check_branch
    %402 = sbr.rel (0) target = $region29
  $region28: #{attention_forward.1} parent=0 // pred_region
    _
  $region29: #{attention_forward.1} parent=0 // pred_fallthru
    _
  // Predicated region
  $region30: #{attention_forward.1} parent=0 // pred_check
    _
  $region31: #{attention_forward.1} parent=0 // pred_check_branch
    %404 = sbr.rel (0) target = $region33
  $region32: #{attention_forward.1} parent=0 // pred_region
    _
  $region33: #{attention_forward.1} parent=0 // pred_fallthru
    _

</llo_original>
